<compile_context>
chip_gen: v5e
topology: v5e:2x2
jax: 0.10.0
libtpu: 0.0.40
codegen_flags: <defaults>
</compile_context>

<pallas_src>
import jax
import jax.numpy as jnp
from jax.experimental import pallas as pl
from jax.experimental.pallas import tpu as pltpu

FOCUS_PARAM = 2        # focal exponent (module default, Python int -> integer_pow)
BALANCE_PARAM = 0.25   # balance weight (module default)

LANES = 1024           # preferred lane width (multiple of 128)
ROW_TILE = 256         # row tile: (256, 1024) f32 = 1 MiB/array/block
                       # -> 4 arrays x 2 buffers = 8 MiB, fits every chip's
                       #    default scoped VMEM (v5e 16 MiB, v6e/v7x 32 MiB)


def _pss_bce_kernel(o1_ref, o2_ref, t_ref, out_ref):
    o1 = o1_ref[...].astype(jnp.float32)
    o2 = o2_ref[...].astype(jnp.float32)
    t = t_ref[...].astype(jnp.float32)

    # outputs = logit(sqrt(sigmoid(o1) * sigmoid(o2) + 1e-6))
    s1 = jax.nn.sigmoid(o1)
    s2 = jax.nn.sigmoid(o2)
    q = s1 * s2 + 1e-6
    p = jnp.sqrt(q)
    log_p = 0.5 * jnp.log(q)        # log(sqrt(q)) without the serial sqrt->log dep
    log1m_p = jnp.log1p(-p)
    x = log_p - log1m_p             # torch.logit(p)

    # BCEWithLogitsLoss(reduction='none'):
    #   bce = max(x,0) - x*t + log1p(exp(-|x|))
    # logpt = -bce, rearranged exactly (sigmoid(x) == p) to avoid the
    # exp(-|x|)/log1p pair:
    #   logpt = x*t - max(x,0) + (log_p      if x >= 0
    #                             log1m_p    otherwise)
    logpt = x * t - jnp.maximum(x, 0.0) + jnp.where(x >= 0.0, log_p, log1m_p)
    pt = jnp.exp(logpt)

    focal = -((1.0 - pt) ** FOCUS_PARAM) * logpt
    out_ref[...] = (BALANCE_PARAM * focal).astype(out_ref.dtype)


def pss_bce_loss(outputs1, outputs2, targets):
    """Focal-weighted BCE on logit(sqrt(sig(o1)*sig(o2)+1e-6)); reduction='none'."""
    assert outputs1.shape == outputs2.shape == targets.shape
    orig_shape = outputs1.shape
    out_dtype = outputs1.dtype

    total = int(outputs1.size)

    # Pick the widest lane dim (multiple of 128) that divides the flat length;
    # only pad (a tiny tail) if nothing divides.
    lanes = None
    for w in (LANES, 512, 256, 128):
        if total % w == 0:
            lanes = w
            break
    pad = 0
    if lanes is None:
        lanes = 128
        pad = (-total) % lanes  # rare tail pad only

    padded_total = total + pad
    rows = padded_total // lanes

    def _flat(a):
        a = a.reshape(-1)          # reshape of contiguous array: free
        if pad:
            a = jnp.pad(a, (0, pad))
        return a.reshape(rows, lanes)

    o1f, o2f, tf = _flat(outputs1), _flat(outputs2), _flat(targets)

    # Row block: big tile when possible, otherwise the full (small) row extent.
    rb = ROW_TILE if rows >= ROW_TILE else rows
    grid = (pl.cdiv(rows, rb),)          # Pallas masks the partial edge block
    spec = pl.BlockSpec((rb, lanes), lambda i: (i, 0))

    out = pl.pallas_call(
        _pss_bce_kernel,
        out_shape=jax.ShapeDtypeStruct((rows, lanes), out_dtype),
        grid=grid,
        in_specs=[spec, spec, spec],
        out_specs=spec,
        compiler_params=pltpu.CompilerParams(
            dimension_semantics=("parallel",),      # shards across TCs on v7x
            vmem_limit_bytes=32 * 1024 * 1024,      # plenty for 8 MiB usage, safe on all gens
        ),
    )(o1f, o2f, tf)

    out = out.reshape(-1)
    if pad:
        out = out[:total]
    return out.reshape(orig_shape)


def _reference(outputs1, outputs2, targets):
    """Pure-JAX reference mirroring the PyTorch module exactly."""
    s1 = jax.nn.sigmoid(outputs1.astype(jnp.float32))
    s2 = jax.nn.sigmoid(outputs2.astype(jnp.float32))
    p = jnp.sqrt(s1 * s2 + 1e-6)
    x = jnp.log(p) - jnp.log1p(-p)
    t = targets.astype(jnp.float32)
    bce = jnp.maximum(x, 0.0) - x * t + jnp.log1p(jnp.exp(-jnp.abs(x)))
    logpt = -bce
    pt = jnp.exp(logpt)
    return BALANCE_PARAM * (-((1.0 - pt) ** FOCUS_PARAM) * logpt)


if __name__ == "__main__":
    key = jax.random.PRNGKey(0)
    k1, k2, k3 = jax.random.split(key, 3)

    # small NCHW-shaped logits and binary targets
    shape = (2, 4, 16, 16)
    outputs1 = jax.random.normal(k1, shape, dtype=jnp.float32)
    outputs2 = jax.random.normal(k2, shape, dtype=jnp.float32)
    targets = (jax.random.uniform(k3, shape) > 0.5).astype(jnp.float32)

    loss = pss_bce_loss(outputs1, outputs2, targets)
    loss = jax.block_until_ready(loss)

    ref = _reference(outputs1, outputs2, targets)
    assert loss.shape == shape
    assert jnp.allclose(loss, ref, atol=1e-5, rtol=1e-4), "mismatch vs reference"

    print("KERNEL_OK")
</pallas_src>

<mosaic_0001>
module attributes {stable_mosaic.version = 11 : i64} {
  func.func @_pss_bce_kernel(%arg0: i32, %arg1: memref<2x1024xf32, #tpu.memory_space<vmem>>, %arg2: memref<2x1024xf32, #tpu.memory_space<vmem>>, %arg3: memref<2x1024xf32, #tpu.memory_space<vmem>>, %arg4: memref<2x1024xf32, #tpu.memory_space<vmem>>) attributes {dimension_semantics = [#tpu.dimension_semantics<parallel>], iteration_bounds = array<i64: 1>, scalar_prefetch = 0 : i64, scratch_operands = 0 : i64, tpu.core_type = #tpu.core_type<tc>, window_params = [{transform_indices = @transform_0, window_bounds = array<i64: 2, 1024>}, {transform_indices = @transform_1, window_bounds = array<i64: 2, 1024>}, {transform_indices = @transform_2, window_bounds = array<i64: 2, 1024>}, {transform_indices = @transform_3, window_bounds = array<i64: 2, 1024>}]} {
    %c0 = arith.constant 0 : index
    %c0_0 = arith.constant 0 : index
    %0 = vector.load %arg1[%c0, %c0_0] : memref<2x1024xf32, #tpu.memory_space<vmem>>, vector<2x1024xf32>
    %c0_1 = arith.constant 0 : index
    %c0_2 = arith.constant 0 : index
    %1 = vector.load %arg2[%c0_1, %c0_2] : memref<2x1024xf32, #tpu.memory_space<vmem>>, vector<2x1024xf32>
    %c0_3 = arith.constant 0 : index
    %c0_4 = arith.constant 0 : index
    %2 = vector.load %arg3[%c0_3, %c0_4] : memref<2x1024xf32, #tpu.memory_space<vmem>>, vector<2x1024xf32>
    %3 = arith.negf %0 : vector<2x1024xf32>
    %4 = math.exp %3 : vector<2x1024xf32>
    %cst = arith.constant 1.000000e+00 : f32
    %5 = vector.broadcast %cst : f32 to vector<2x1024xf32>
    %6 = arith.addf %5, %4 : vector<2x1024xf32>
    %7 = arith.divf %5, %6 : vector<2x1024xf32>
    %8 = arith.negf %1 : vector<2x1024xf32>
    %9 = math.exp %8 : vector<2x1024xf32>
    %cst_5 = arith.constant 1.000000e+00 : f32
    %10 = vector.broadcast %cst_5 : f32 to vector<2x1024xf32>
    %11 = arith.addf %10, %9 : vector<2x1024xf32>
    %12 = arith.divf %10, %11 : vector<2x1024xf32>
    %13 = arith.mulf %7, %12 : vector<2x1024xf32>
    %cst_6 = arith.constant 9.99999997E-7 : f32
    %14 = vector.broadcast %cst_6 : f32 to vector<2x1024xf32>
    %15 = arith.addf %13, %14 : vector<2x1024xf32>
    %16 = math.sqrt %15 : vector<2x1024xf32>
    %17 = math.log %15 : vector<2x1024xf32>
    %cst_7 = arith.constant 5.000000e-01 : f32
    %18 = vector.broadcast %cst_7 : f32 to vector<2x1024xf32>
    %19 = arith.mulf %18, %17 : vector<2x1024xf32>
    %cst_8 = arith.constant 0.000000e+00 : f32
    %20 = vector.broadcast %cst_8 : f32 to vector<2x1024xf32>
    %21 = arith.subf %20, %16 : vector<2x1024xf32>
    %22 = math.log1p %21 : vector<2x1024xf32>
    %23 = arith.subf %19, %22 : vector<2x1024xf32>
    %24 = arith.mulf %23, %2 : vector<2x1024xf32>
    %cst_9 = arith.constant 0.000000e+00 : f32
    %25 = vector.broadcast %cst_9 : f32 to vector<2x1024xf32>
    %26 = arith.maximumf %23, %25 : vector<2x1024xf32>
    %27 = arith.subf %24, %26 : vector<2x1024xf32>
    %cst_10 = arith.constant 0.000000e+00 : f32
    %28 = vector.broadcast %cst_10 : f32 to vector<2x1024xf32>
    %29 = arith.cmpf oge, %23, %28 : vector<2x1024xf32>
    %30 = arith.select %29, %19, %22 : vector<2x1024xi1>, vector<2x1024xf32>
    %31 = arith.addf %27, %30 : vector<2x1024xf32>
    %32 = math.exp %31 : vector<2x1024xf32>
    %cst_11 = arith.constant 1.000000e+00 : f32
    %33 = vector.broadcast %cst_11 : f32 to vector<2x1024xf32>
    %34 = arith.subf %33, %32 : vector<2x1024xf32>
    %35 = arith.mulf %34, %34 : vector<2x1024xf32>
    %cst_12 = arith.constant 0.000000e+00 : f32
    %36 = vector.broadcast %cst_12 : f32 to vector<2x1024xf32>
    %37 = arith.subf %36, %35 : vector<2x1024xf32>
    %38 = arith.mulf %37, %31 : vector<2x1024xf32>
    %cst_13 = arith.constant 2.500000e-01 : f32
    %39 = vector.broadcast %cst_13 : f32 to vector<2x1024xf32>
    %40 = arith.mulf %39, %38 : vector<2x1024xf32>
    %c0_14 = arith.constant 0 : index
    %c0_15 = arith.constant 0 : index
    %41 = vector.load %arg4[%c0_14, %c0_15] : memref<2x1024xf32, #tpu.memory_space<vmem>>, vector<2x1024xf32>
    tpu.vector_store %arg4[%c0_14, %c0_15], %40 {strides = array<i32>} : memref<2x1024xf32, #tpu.memory_space<vmem>>, vector<2x1024xf32>,
    return
  }
  func.func @transform_0(%arg0: i32) -> (i32, i32) {
    %c0_i32 = arith.constant 0 : i32
    %c0_i32_0 = arith.constant 0 : i32
    return %arg0, %c0_i32 : i32, i32
  }
  func.func @transform_1(%arg0: i32) -> (i32, i32) {
    %c0_i32 = arith.constant 0 : i32
    %c0_i32_0 = arith.constant 0 : i32
    return %arg0, %c0_i32 : i32, i32
  }
  func.func @transform_2(%arg0: i32) -> (i32, i32) {
    %c0_i32 = arith.constant 0 : i32
    %c0_i32_0 = arith.constant 0 : i32
    return %arg0, %c0_i32 : i32, i32
  }
  func.func @transform_3(%arg0: i32) -> (i32, i32) {
    %c0_i32 = arith.constant 0 : i32
    %c0_i32_0 = arith.constant 0 : i32
    return %arg0, %c0_i32 : i32, i32
  }
}

</mosaic_0001>

<llo_original>
// kernel: tpu_custom_call.1
$region0: #{tpu_custom_call.1}
  #allocation0 [shape = 'u32[]', space=smem, size = 0x4, offset = 0x4, fixed_abs, tag = 'smem constant byte address 0x4 - core index']
  #allocation1 [shape = 'u32[72,128]{1,0:T(1,128)}', space=vmem, size = 0x9000, scoped, tag = 'internal scratch']
  %s0 = inlined_call_operand.hbm [shape: f32[2,1024], index: 0, kind: input, shape index: {}]
  %s1 = inlined_call_operand.hbm [shape: f32[2,1024], index: 1, kind: input, shape index: {}]
  %s2 = inlined_call_operand.hbm [shape: f32[2,1024], index: 2, kind: input, shape index: {}]
  %s3 = inlined_call_operand.hbm [shape: f32[2,1024], index: 3, kind: output, shape index: {}]
  %s4 = sld [smem:[#allocation0]]
  $region34: #{tpu_custom_call.1} parent=0
    _
  %s6 = ssub.s32 1, %s4
  %s7 = scalar_select 0, %s6, %s4
  $region1: #{tpu_custom_call.1} parent=0
    #allocation2 [shape = 'u8[8192]{0}', space=vmem, size = 0x2000, scoped, tag = 'input window, operand 0, single buffered']
    #allocation3 [shape = 's32[1]{0}', space=sflag, size = 0x4, scoped, tag = 'scoped memory for tpu_custom_call.1']
    #allocation4 [shape = 's32[1]{0}', space=sflag, size = 0x4, scoped, tag = 'scoped memory for tpu_custom_call.1']
    #allocation5 [shape = 'u8[8192]{0}', space=vmem, size = 0x2000, scoped, tag = 'input window, operand 1, single buffered']
    #allocation6 [shape = 's32[1]{0}', space=sflag, size = 0x4, scoped, tag = 'scoped memory for tpu_custom_call.1']
    #allocation7 [shape = 'u8[8192]{0}', space=vmem, size = 0x2000, scoped, tag = 'input window, operand 2, single buffered']
    #allocation8 [shape = 'u8[8192]{0}', space=vmem, size = 0x2000, scoped, tag = 'output window, operand 0, single buffered']
    %8 = vsyncpa [#allocation3], 0
    %9 = vsyncpa [#allocation6], 0
    %10 = vsyncpa [#allocation4], 0
    // Predicated region
    $region2: #{tpu_custom_call.1} parent=1 // pred_check
      _
    $region3: #{tpu_custom_call.1} parent=1 // pred_check_branch
      %12 = sbr.rel (0) target = $region5
    $region4: #{tpu_custom_call.1} parent=1 // pred_region
      %14 = vsyncadd [#allocation3], 0
      %s16 = sshll.u32 %s0, 4
      %s17 = int_to_ptr.hbm [resolvable:$true] %s16
      %s18 = sshll.u32 [#allocation2], 4
      %s19 = int_to_ptr.vmem [resolvable:$true] %s18
      %21 = dma.hbm_to_vmem [thread:$0]  %s17, 256, %s19, [#allocation3]
    $region5: #{tpu_custom_call.1} parent=1 // pred_fallthru
      _
    // Predicated region
    $region6: #{tpu_custom_call.1} parent=1 // pred_check
      _
    $region7: #{tpu_custom_call.1} parent=1 // pred_check_branch
      %23 = sbr.rel (0) target = $region9
    $region8: #{tpu_custom_call.1} parent=1 // pred_region
      %25 = vsyncadd [#allocation6], 0
      %s27 = sshll.u32 %s1, 4
      %s28 = int_to_ptr.hbm [resolvable:$true] %s27
      %s29 = sshll.u32 [#allocation5], 4
      %s30 = int_to_ptr.vmem [resolvable:$true] %s29
      %32 = dma.hbm_to_vmem [thread:$0]  %s28, 256, %s30, [#allocation6]
    $region9: #{tpu_custom_call.1} parent=1 // pred_fallthru
      _
    // Predicated region
    $region10: #{tpu_custom_call.1} parent=1 // pred_check
      _
    $region11: #{tpu_custom_call.1} parent=1 // pred_check_branch
      %34 = sbr.rel (0) target = $region13
    $region12: #{tpu_custom_call.1} parent=1 // pred_region
      %36 = vsyncadd [#allocation6], 0
      %s38 = sshll.u32 %s2, 4
      %s39 = int_to_ptr.hbm [resolvable:$true] %s38
      %s40 = sshll.u32 [#allocation7], 4
      %s41 = int_to_ptr.vmem [resolvable:$true] %s40
      %43 = dma.hbm_to_vmem [thread:$0]  %s39, 256, %s41, [#allocation6]
    $region13: #{tpu_custom_call.1} parent=1 // pred_fallthru
      _
    // Predicated region
    $region14: #{tpu_custom_call.1} parent=1 // pred_check
      _
    $region15: #{tpu_custom_call.1} parent=1 // pred_check_branch
      %45 = sbr.rel (0) target = $region17
    $region16: #{tpu_custom_call.1} parent=1 // pred_region
      %47 = dma.done [#allocation3], 256
    $region17: #{tpu_custom_call.1} parent=1 // pred_fallthru
      _
    // Predicated region
    $region18: #{tpu_custom_call.1} parent=1 // pred_check
      _
    $region19: #{tpu_custom_call.1} parent=1 // pred_check_branch
      %49 = sbr.rel (0) target = $region21
    $region20: #{tpu_custom_call.1} parent=1 // pred_region
      %51 = dma.done [#allocation6], 256
    $region21: #{tpu_custom_call.1} parent=1 // pred_fallthru
      _
    // Predicated region
    $region22: #{tpu_custom_call.1} parent=1 // pred_check
      _
    $region23: #{tpu_custom_call.1} parent=1 // pred_check_branch
      %53 = sbr.rel (0) target = $region25
    $region24: #{tpu_custom_call.1} parent=1 // pred_region
      %55 = dma.done [#allocation6], 256
    $region25: #{tpu_custom_call.1} parent=1 // pred_fallthru
      _
    %v56 = vld [vmem:[#allocation2] sm:$0xff]
    %v57 = vld [vmem:[#allocation2 + $0x8] sm:$0xff]
    %v58 = vld [vmem:[#allocation5] sm:$0xff]
    %v59 = vld [vmem:[#allocation5 + $0x8] sm:$0xff]
    %v60 = vld [vmem:[#allocation7] sm:$0xff]
    %v61 = vld [vmem:[#allocation7 + $0x8] sm:$0xff]
    %v62 = vxor.u32 %v56, 2147483648
    %v63 = vxor.u32 %v57, 2147483648
    %v64 = vmul.f32 %v62, 1.442695
    %v65 = vpow.pop %v64
    %v66 = vmul.f32 %v63, 1.442695
    %v67 = vpow.pop %v66
    %v68 = vadd.f32 %v65, 1.0
    %v69 = vadd.f32 %v67, 1.0
    %v70 = vrcp.pop %v68
    %v71 = vmul.f32 %v68, %v70
    %v72 = vsub.f32 1.0, %v71
    %v73 = vmul.f32 %v70, %v72
    %v74 = vadd.f32 %v70, %v73
    %vm75 = vweird.f32 %v68
    %vm76 = vweird.f32 %v70
    %vm77 = vmor %vm75, %vm76
    %v78 = vsel %vm77, %v70, %v74
    %v79 = vand.u32 2147483647, %v68
    %vm80 = vcmp.eq.f32.partialorder %v79, 8.507059e+37
    %v81 = vand.u32 %v68, 2147483648
    %v82 = vor.u32 1.1754944e-38, %v81
    %v83 = vsel %vm80, %v82, %v78
    %v84 = vmul.f32 1.0, %v83
    %v85 = vrcp.pop %v69
    %v86 = vmul.f32 %v69, %v85
    %v87 = vsub.f32 1.0, %v86
    %v88 = vmul.f32 %v85, %v87
    %v89 = vadd.f32 %v85, %v88
    %vm90 = vweird.f32 %v69
    %vm91 = vweird.f32 %v85
    %vm92 = vmor %vm90, %vm91
    %v93 = vsel %vm92, %v85, %v89
    %v94 = vand.u32 2147483647, %v69
    %vm95 = vcmp.eq.f32.partialorder %v94, 8.507059e+37
    %v96 = vand.u32 %v69, 2147483648
    %v97 = vor.u32 1.1754944e-38, %v96
    %v98 = vsel %vm95, %v97, %v93
    %v99 = vmul.f32 1.0, %v98
    %v100 = vxor.u32 %v58, 2147483648
    %v101 = vxor.u32 %v59, 2147483648
    %v102 = vmul.f32 %v100, 1.442695
    %v103 = vpow.pop %v102
    %v104 = vmul.f32 %v101, 1.442695
    %v105 = vpow.pop %v104
    %v106 = vadd.f32 %v103, 1.0
    %v107 = vadd.f32 %v105, 1.0
    %v108 = vrcp.pop %v106
    %v109 = vmul.f32 %v106, %v108
    %v110 = vsub.f32 1.0, %v109
    %v111 = vmul.f32 %v108, %v110
    %v112 = vadd.f32 %v108, %v111
    %vm113 = vweird.f32 %v106
    %vm114 = vweird.f32 %v108
    %vm115 = vmor %vm113, %vm114
    %v116 = vsel %vm115, %v108, %v112
    %v117 = vand.u32 2147483647, %v106
    %vm118 = vcmp.eq.f32.partialorder %v117, 8.507059e+37
    %v119 = vand.u32 %v106, 2147483648
    %v120 = vor.u32 1.1754944e-38, %v119
    %v121 = vsel %vm118, %v120, %v116
    %v122 = vmul.f32 1.0, %v121
    %v123 = vrcp.pop %v107
    %v124 = vmul.f32 %v107, %v123
    %v125 = vsub.f32 1.0, %v124
    %v126 = vmul.f32 %v123, %v125
    %v127 = vadd.f32 %v123, %v126
    %vm128 = vweird.f32 %v107
    %vm129 = vweird.f32 %v123
    %vm130 = vmor %vm128, %vm129
    %v131 = vsel %vm130, %v123, %v127
    %v132 = vand.u32 2147483647, %v107
    %vm133 = vcmp.eq.f32.partialorder %v132, 8.507059e+37
    %v134 = vand.u32 %v107, 2147483648
    %v135 = vor.u32 1.1754944e-38, %v134
    %v136 = vsel %vm133, %v135, %v131
    %v137 = vmul.f32 1.0, %v136
    %v138 = vmul.f32 %v84, %v122
    %v139 = vmul.f32 %v99, %v137
    %v140 = vadd.f32 %v138, 1e-06
    %v141 = vadd.f32 %v139, 1e-06
    %v142 = vrsqrt.pop %v140
    %v143 = vmul.f32 %v142, %v140
    %v144 = vmul.f32 %v143, %v142
    %v145 = vmul.f32 0.5, %v144
    %v146 = vsub.f32 1.5, %v145
    %v147 = vmul.f32 %v142, %v146
    %v148 = vmul.f32 %v140, %v147
    %vm149 = vcmp.eq.f32.partialorder %v140, inf
    %v150 = vsel %vm149, %v140, %v148
    %vm151 = vcmp.eq.f32.partialorder %v140, 0.0
    %v152 = vand.u32 %v140, 2147483648
    %v153 = vsel %vm151, %v152, %v150
    %v154 = vrsqrt.pop %v141
    %v155 = vmul.f32 %v154, %v141
    %v156 = vmul.f32 %v155, %v154
    %v157 = vmul.f32 0.5, %v156
    %v158 = vsub.f32 1.5, %v157
    %v159 = vmul.f32 %v154, %v158
    %v160 = vmul.f32 %v141, %v159
    %vm161 = vcmp.eq.f32.partialorder %v141, inf
    %v162 = vsel %vm161, %v141, %v160
    %vm163 = vcmp.eq.f32.partialorder %v141, 0.0
    %v164 = vand.u32 %v141, 2147483648
    %v165 = vsel %vm163, %v164, %v162
    %v166 = vlog2.pop %v140
    %v167 = vmul.f32 %v166, 0.6931472
    %v168 = vlog2.pop %v141
    %v169 = vmul.f32 %v168, 0.6931472
    %v170 = vmul.f32 %v167, 0.5
    %v171 = vmul.f32 %v169, 0.5
    %v172 = vsub.f32 0.0, %v153
    %v173 = vsub.f32 0.0, %v165
    %v174 = vadd.f32 %v172, 1.0
    %v175 = vlog2.pop %v174
    %v176 = vmul.f32 %v175, 0.6931472
    %v177 = vmul.f32 -0.5, %v172
    %v178 = vadd.f32 %v177, 1.0
    %v179 = vmul.f32 %v178, %v172
    %v180 = vand.u32 2147483647, %v172
    %vm181 = vcmp.lt.f32.partialorder %v180, 0.0004427343
    %v182 = vsel %vm181, %v179, %v176
    %v183 = vadd.f32 %v173, 1.0
    %v184 = vlog2.pop %v183
    %v185 = vmul.f32 %v184, 0.6931472
    %v186 = vmul.f32 -0.5, %v173
    %v187 = vadd.f32 %v186, 1.0
    %v188 = vmul.f32 %v187, %v173
    %v189 = vand.u32 2147483647, %v173
    %vm190 = vcmp.lt.f32.partialorder %v189, 0.0004427343
    %v191 = vsel %vm190, %v188, %v185
    %v192 = vsub.f32 %v170, %v182
    %v193 = vsub.f32 %v171, %v191
    %v194 = vmul.f32 %v192, %v60
    %v195 = vmul.f32 %v193, %v61
    %v196 = vmax.f32 %v192, 0.0
    %v197 = vmax.f32 %v193, 0.0
    %v198 = vsub.f32 %v194, %v196
    %v199 = vsub.f32 %v195, %v197
    %vm200 = vcmp.ge.f32.partialorder %v192, 0.0
    %vm201 = vcmp.ge.f32.partialorder %v193, 0.0
    %v202 = vsel %vm200, %v170, %v182
    %v203 = vsel %vm201, %v171, %v191
    %v204 = vadd.f32 %v198, %v202
    %v205 = vadd.f32 %v199, %v203
    %v206 = vmul.f32 %v204, 1.442695
    %v207 = vpow.pop %v206
    %v208 = vmul.f32 %v205, 1.442695
    %v209 = vpow.pop %v208
    %v210 = vsub.f32 1.0, %v207
    %v211 = vsub.f32 1.0, %v209
    %v212 = vmul.f32 %v210, %v210
    %v213 = vmul.f32 %v211, %v211
    %v214 = vsub.f32 0.0, %v212
    %v215 = vsub.f32 0.0, %v213
    %v216 = vmul.f32 %v214, %v204
    %v217 = vmul.f32 %v215, %v205
    %v218 = vmul.f32 %v216, 0.25
    %v219 = vmul.f32 %v217, 0.25
    %220 = vst [vmem:[#allocation8] sm:$0xff] %v218
    %221 = vst [vmem:[#allocation8 + $0x8] sm:$0xff] %v219
    // Predicated region
    $region26: #{tpu_custom_call.1} parent=1 // pred_check
      _
    $region27: #{tpu_custom_call.1} parent=1 // pred_check_branch
      %223 = sbr.rel (0) target = $region29
    $region28: #{tpu_custom_call.1} parent=1 // pred_region
      %225 = vsyncadd [#allocation4], 0
      %s227 = sshll.u32 [#allocation8], 4
      %s228 = int_to_ptr.vmem [resolvable:$true] %s227
      %s229 = sshll.u32 %s3, 4
      %s230 = int_to_ptr.hbm [resolvable:$true] %s229
      %232 = dma.vmem_to_hbm [thread:$0]  %s228, 256, %s230, [#allocation4]
    $region29: #{tpu_custom_call.1} parent=1 // pred_fallthru
      _
    // Predicated region
    $region30: #{tpu_custom_call.1} parent=1 // pred_check
      _
    $region31: #{tpu_custom_call.1} parent=1 // pred_check_branch
      %234 = sbr.rel (0) target = $region33
    $region32: #{tpu_custom_call.1} parent=1 // pred_region
      %236 = dma.done [#allocation4], 256
    $region33: #{tpu_custom_call.1} parent=1 // pred_fallthru
      _
    %237 = vsyncpa [#allocation3], 1
    %238 = vsyncpa [#allocation6], 1
    %239 = vsyncpa [#allocation4], 1

</llo_original>
